<compile_context>
chip_gen: v7x
topology: tpu7x:2x2x1
jax: 0.10.0
libtpu: 0.0.40
codegen_flags: <defaults>
</compile_context>

<pallas_src>
import jax
import jax.numpy as jnp
from jax.experimental import pallas as pl
from jax.experimental.pallas import tpu as pltpu

LANE = 128  # lane width (also matches the v5e 128x128 MXU; keep 128 on all generations)
SUB = 8     # f32 sublane count


def _round_up(x, m):
    return (x + m - 1) // m * m


def _make_dnn_kernel(num_layers):
    """One fused MLP body for `num_layers` Linear+ReLU layers."""

    def kernel(*refs):
        x_ref = refs[0]
        w_refs = refs[1:1 + num_layers]
        b_refs = refs[1 + num_layers:1 + 2 * num_layers]
        out_ref = refs[1 + 2 * num_layers]

        h = x_ref[...]  # bf16 tile, fed straight to the MXU (no f32 up-cast)
        for i in range(num_layers):
            acc = jnp.dot(h, w_refs[i][...],                    # bf16 x bf16 on the MXU
                          preferred_element_type=jnp.float32)   # f32 accumulation
            acc = jnp.maximum(acc + b_refs[i][...], 0.0)        # f32 bias + ReLU (VPU)
            # dropout_rate=0 -> identity; use_bn=False -> no BatchNorm (module defaults).
            if i + 1 < num_layers:
                h = acc.astype(jnp.bfloat16)   # carry bf16 between layers
            else:
                out_ref[...] = acc.astype(out_ref.dtype)

    return kernel


def prepare_dnn_params(weights, biases):
    """Hoisted to parameter-load time: transpose (PyTorch (out,in) -> (in,out)),
    zero-pad to lane-dense shapes, cast weights to bf16 (biases stay f32)."""
    num_layers = len(weights)
    out_dims = [int(w.shape[0]) for w in weights]
    in_dims = [int(w.shape[1]) for w in weights]
    in_p = [_round_up(d, LANE) for d in in_dims]
    out_p = [_round_up(d, LANE) for d in out_dims]

    w_pads, b_pads = [], []
    for i in range(num_layers):
        wt = jnp.asarray(weights[i]).T.astype(jnp.bfloat16)          # (in_i, out_i)
        w_pads.append(jnp.zeros((in_p[i], out_p[i]), jnp.bfloat16)
                      .at[:in_dims[i], :out_dims[i]].set(wt))
        b_pads.append(jnp.zeros((1, out_p[i]), jnp.float32)
                      .at[0, :out_dims[i]].set(jnp.asarray(biases[i], jnp.float32)))

    meta = dict(in_dims=in_dims, out_dims=out_dims, in_p=in_p, out_p=out_p,
                num_layers=num_layers)
    return w_pads, b_pads, meta


def _pick_vmem_limit(needed_bytes):
    """Raise the scoped VMEM limit above the generation default, capped below physical."""
    try:
        cap = int(pltpu.get_tpu_info().vmem_capacity_bytes)   # 128 MiB v5e/v6e, 64 MiB v7x
    except Exception:
        cap = 64 << 20  # conservative (v7x per-TensorCore)
    return int(min(max(needed_bytes, 32 << 20), cap - (8 << 20)))


def dnn_forward(x, w_pads, b_pads, meta, *, block_b=256, out_dtype=None):
    """DNN.forward.  x: (B, inputs_dim) -> (B, hidden_units[-1])."""
    B, d_in = x.shape
    num_layers = meta["num_layers"]
    in_p, out_p = meta["in_p"], meta["out_p"]
    d_in_p = in_p[0]
    assert d_in == meta["in_dims"][0], "input dim mismatch with prepared params"
    out_dtype = out_dtype or x.dtype

    # ---- batch tiling: pad the batch UP to a multiple of a fixed, MXU-friendly tile.
    b_aligned = _round_up(B, SUB)
    block_b = min(_round_up(block_b, SUB), b_aligned)
    # Megacore (v7x): prefer >= 2 tiles on the parallel axis when the batch allows it.
    if b_aligned // block_b < 2 and b_aligned > SUB:
        block_b = max(SUB, _round_up((b_aligned + 1) // 2, SUB))
    b_p = _round_up(b_aligned, block_b)
    grid = (b_p // block_b,)

    # ---- input: cast to bf16 + zero-pad (skip materialization when already aligned).
    if B == b_p and d_in == d_in_p and x.dtype == jnp.bfloat16:
        x_pad = x
    else:
        x_pad = (jnp.zeros((b_p, d_in_p), jnp.bfloat16)
                 .at[:B, :d_in].set(x.astype(jnp.bfloat16)))

    # ---- explicit VMEM budget (weights single-buffered, activations double-buffered).
    weight_bytes = sum(ip * op for ip, op in zip(in_p, out_p)) * 2          # bf16, Buffered(1)
    bias_bytes = sum(SUB * op * 4 for op in out_p)                          # f32, sublane-padded
    act_bytes = 2 * block_b * d_in_p * 2 + 2 * block_b * out_p[-1] * jnp.dtype(out_dtype).itemsize
    scratch_margin = block_b * max(out_p) * 4 * 2 + (4 << 20)               # intermediates + slack
    vmem_limit = _pick_vmem_limit(weight_bytes + bias_bytes + act_bytes + scratch_margin)

    def _run(single_buffer_weights):
        const_kw = dict(pipeline_mode=pl.Buffered(1)) if single_buffer_weights else {}
        in_specs = [pl.BlockSpec((block_b, d_in_p), lambda i: (i, 0))]
        for k in range(num_layers):  # weights: same block every step -> VMEM-resident
            in_specs.append(pl.BlockSpec((in_p[k], out_p[k]), lambda i: (0, 0), **const_kw))
        for k in range(num_layers):  # biases
            in_specs.append(pl.BlockSpec((1, out_p[k]), lambda i: (0, 0), **const_kw))
        out_spec = pl.BlockSpec((block_b, out_p[-1]), lambda i: (i, 0))

        y = pl.pallas_call(
            _make_dnn_kernel(num_layers),
            out_shape=jax.ShapeDtypeStruct((b_p, out_p[-1]), out_dtype),
            grid=grid,
            in_specs=in_specs,
            out_specs=out_spec,
            compiler_params=pltpu.CompilerParams(
                dimension_semantics=("parallel",),   # batch tiles split across TCs (v7x)
                vmem_limit_bytes=vmem_limit),
        )(x_pad, *w_pads, *b_pads)
        return jax.block_until_ready(y)

    try:
        y_pad = _run(True)
    except Exception:
        # TODO(synk): drop this fallback once single-buffered (Buffered(1)) constant
        # blocks are guaranteed on the installed JAX/Mosaic version.
        y_pad = _run(False)

    return y_pad[:B, :meta["out_dims"][-1]]


def _reference(x, weights, biases):
    h = x
    for w, b in zip(weights, biases):
        h = jnp.maximum(h @ w.T + b, 0.0)
    return h


if __name__ == "__main__":
    B, INPUTS_DIM = 8, 16
    HIDDEN_UNITS = (32, 32)

    key = jax.random.PRNGKey(0)
    k_x, *k_params = jax.random.split(key, 1 + 2 * len(HIDDEN_UNITS))

    x = jax.random.normal(k_x, (B, INPUTS_DIM), dtype=jnp.float32)

    dims = [INPUTS_DIM] + list(HIDDEN_UNITS)
    weights, biases = [], []
    for i in range(len(HIDDEN_UNITS)):
        weights.append(0.1 * jax.random.normal(
            k_params[2 * i], (dims[i + 1], dims[i]), dtype=jnp.float32))
        biases.append(0.1 * jax.random.normal(
            k_params[2 * i + 1], (dims[i + 1],), dtype=jnp.float32))

    # Parameter prep (transpose / pad / bf16 cast) done once, at load time.
    w_pads, b_pads, meta = prepare_dnn_params(weights, biases)

    y = dnn_forward(x, w_pads, b_pads, meta)
    y = jax.block_until_ready(y)

    ref = _reference(x, weights, biases)
    assert y.shape == (B, HIDDEN_UNITS[-1])
    # bf16 matmul operands with f32 accumulation -> small drift vs the f32 reference.
    assert jnp.allclose(y, ref, atol=3e-2, rtol=3e-2), "mismatch vs. reference"

    print("KERNEL_OK")
</pallas_src>

<mosaic_0001>
module attributes {stable_mosaic.version = 11 : i64} {
  func.func @kernel(%arg0: i32, %arg1: memref<8x128xbf16, #tpu.memory_space<vmem>>, %arg2: memref<128x128xbf16, #tpu.memory_space<vmem>>, %arg3: memref<128x128xbf16, #tpu.memory_space<vmem>>, %arg4: memref<1x128xf32, #tpu.memory_space<vmem>>, %arg5: memref<1x128xf32, #tpu.memory_space<vmem>>, %arg6: memref<8x128xf32, #tpu.memory_space<vmem>>) attributes {dimension_semantics = [#tpu.dimension_semantics<parallel>], iteration_bounds = array<i64: 1>, scalar_prefetch = 0 : i64, scratch_operands = 0 : i64, tpu.core_type = #tpu.core_type<tc>, window_params = [{transform_indices = @transform_0, window_bounds = array<i64: 8, 128>}, {pipeline_mode = #tpu.pipeline_mode<synchronous>, transform_indices = @transform_1, window_bounds = array<i64: 128, 128>}, {pipeline_mode = #tpu.pipeline_mode<synchronous>, transform_indices = @transform_2, window_bounds = array<i64: 128, 128>}, {pipeline_mode = #tpu.pipeline_mode<synchronous>, transform_indices = @transform_3, window_bounds = array<i64: 1, 128>}, {pipeline_mode = #tpu.pipeline_mode<synchronous>, transform_indices = @transform_4, window_bounds = array<i64: 1, 128>}, {transform_indices = @transform_5, window_bounds = array<i64: 8, 128>}]} {
    %c0 = arith.constant 0 : index
    %c0_0 = arith.constant 0 : index
    %0 = vector.load %arg1[%c0, %c0_0] : memref<8x128xbf16, #tpu.memory_space<vmem>>, vector<8x128xbf16>
    %c0_1 = arith.constant 0 : index
    %c0_2 = arith.constant 0 : index
    %1 = vector.load %arg2[%c0_1, %c0_2] : memref<128x128xbf16, #tpu.memory_space<vmem>>, vector<128x128xbf16>
    %cst = arith.constant dense<0.000000e+00> : vector<8x128xf32>
    %2 = tpu.matmul %0, %1, %cst {dimension_numbers = #tpu.dot_dimension_numbers<[1], [0], [0], [1], [0, 0, 1, 1], [], []>} : vector<8x128xbf16>, vector<128x128xbf16>, vector<8x128xf32> -> vector<8x128xf32>
    %c0_3 = arith.constant 0 : index
    %c0_4 = arith.constant 0 : index
    %3 = vector.load %arg4[%c0_3, %c0_4] : memref<1x128xf32, #tpu.memory_space<vmem>>, vector<1x128xf32>
    %4 = vector.broadcast %3 : vector<1x128xf32> to vector<8x128xf32>
    %5 = arith.addf %2, %4 : vector<8x128xf32>
    %cst_5 = arith.constant 0.000000e+00 : f32
    %6 = vector.broadcast %cst_5 : f32 to vector<8x128xf32>
    %7 = arith.maximumf %5, %6 : vector<8x128xf32>
    %8 = arith.truncf %7 : vector<8x128xf32> to vector<8x128xbf16>
    %c0_6 = arith.constant 0 : index
    %c0_7 = arith.constant 0 : index
    %9 = vector.load %arg3[%c0_6, %c0_7] : memref<128x128xbf16, #tpu.memory_space<vmem>>, vector<128x128xbf16>
    %cst_8 = arith.constant dense<0.000000e+00> : vector<8x128xf32>
    %10 = tpu.matmul %8, %9, %cst_8 {dimension_numbers = #tpu.dot_dimension_numbers<[1], [0], [0], [1], [0, 0, 1, 1], [], []>} : vector<8x128xbf16>, vector<128x128xbf16>, vector<8x128xf32> -> vector<8x128xf32>
    %c0_9 = arith.constant 0 : index
    %c0_10 = arith.constant 0 : index
    %11 = vector.load %arg5[%c0_9, %c0_10] : memref<1x128xf32, #tpu.memory_space<vmem>>, vector<1x128xf32>
    %12 = vector.broadcast %11 : vector<1x128xf32> to vector<8x128xf32>
    %13 = arith.addf %10, %12 : vector<8x128xf32>
    %cst_11 = arith.constant 0.000000e+00 : f32
    %14 = vector.broadcast %cst_11 : f32 to vector<8x128xf32>
    %15 = arith.maximumf %13, %14 : vector<8x128xf32>
    %c0_12 = arith.constant 0 : index
    %c0_13 = arith.constant 0 : index
    %16 = vector.load %arg6[%c0_12, %c0_13] : memref<8x128xf32, #tpu.memory_space<vmem>>, vector<8x128xf32>
    tpu.vector_store %arg6[%c0_12, %c0_13], %15 {strides = array<i32>} : memref<8x128xf32, #tpu.memory_space<vmem>>, vector<8x128xf32>,
    return
  }
  func.func @transform_0(%arg0: i32) -> (i32, i32) {
    %c0_i32 = arith.constant 0 : i32
    %c0_i32_0 = arith.constant 0 : i32
    return %arg0, %c0_i32 : i32, i32
  }
  func.func @transform_1(%arg0: i32) -> (i32, i32) {
    %c0_i32 = arith.constant 0 : i32
    %c0_i32_0 = arith.constant 0 : i32
    %c0_i32_1 = arith.constant 0 : i32
    return %c0_i32, %c0_i32_0 : i32, i32
  }
  func.func @transform_2(%arg0: i32) -> (i32, i32) {
    %c0_i32 = arith.constant 0 : i32
    %c0_i32_0 = arith.constant 0 : i32
    %c0_i32_1 = arith.constant 0 : i32
    return %c0_i32, %c0_i32_0 : i32, i32
  }
  func.func @transform_3(%arg0: i32) -> (i32, i32) {
    %c0_i32 = arith.constant 0 : i32
    %c0_i32_0 = arith.constant 0 : i32
    %c0_i32_1 = arith.constant 0 : i32
    return %c0_i32, %c0_i32_0 : i32, i32
  }
  func.func @transform_4(%arg0: i32) -> (i32, i32) {
    %c0_i32 = arith.constant 0 : i32
    %c0_i32_0 = arith.constant 0 : i32
    %c0_i32_1 = arith.constant 0 : i32
    return %c0_i32, %c0_i32_0 : i32, i32
  }
  func.func @transform_5(%arg0: i32) -> (i32, i32) {
    %c0_i32 = arith.constant 0 : i32
    %c0_i32_0 = arith.constant 0 : i32
    return %arg0, %c0_i32 : i32, i32
  }
}

module attributes {stable_mosaic.version = 11 : i64} {
  func.func @kernel(%arg0: i32, %arg1: memref<8x128xbf16, #tpu.memory_space<vmem>>, %arg2: memref<128x128xbf16, #tpu.memory_space<vmem>>, %arg3: memref<128x128xbf16, #tpu.memory_space<vmem>>, %arg4: memref<1x128xf32, #tpu.memory_space<vmem>>, %arg5: memref<1x128xf32, #tpu.memory_space<vmem>>, %arg6: memref<8x128xf32, #tpu.memory_space<vmem>>) attributes {dimension_semantics = [#tpu.dimension_semantics<parallel>], iteration_bounds = array<i64: 1>, scalar_prefetch = 0 : i64, scratch_operands = 0 : i64, tpu.core_type = #tpu.core_type<tc>, window_params = [{transform_indices = @transform_0, window_bounds = array<i64: 8, 128>}, {pipeline_mode = #tpu.pipeline_mode<synchronous>, transform_indices = @transform_1, window_bounds = array<i64: 128, 128>}, {pipeline_mode = #tpu.pipeline_mode<synchronous>, transform_indices = @transform_2, window_bounds = array<i64: 128, 128>}, {pipeline_mode = #tpu.pipeline_mode<synchronous>, transform_indices = @transform_3, window_bounds = array<i64: 1, 128>}, {pipeline_mode = #tpu.pipeline_mode<synchronous>, transform_indices = @transform_4, window_bounds = array<i64: 1, 128>}, {transform_indices = @transform_5, window_bounds = array<i64: 8, 128>}]} {
    %c0 = arith.constant 0 : index
    %c0_0 = arith.constant 0 : index
    %0 = vector.load %arg1[%c0, %c0_0] : memref<8x128xbf16, #tpu.memory_space<vmem>>, vector<8x128xbf16>
    %c0_1 = arith.constant 0 : index
    %c0_2 = arith.constant 0 : index
    %1 = vector.load %arg2[%c0_1, %c0_2] : memref<128x128xbf16, #tpu.memory_space<vmem>>, vector<128x128xbf16>
    %cst = arith.constant dense<0.000000e+00> : vector<8x128xf32>
    %2 = tpu.matmul %0, %1, %cst {dimension_numbers = #tpu.dot_dimension_numbers<[1], [0], [0], [1], [0, 0, 1, 1], [], []>} : vector<8x128xbf16>, vector<128x128xbf16>, vector<8x128xf32> -> vector<8x128xf32>
    %c0_3 = arith.constant 0 : index
    %c0_4 = arith.constant 0 : index
    %3 = vector.load %arg4[%c0_3, %c0_4] : memref<1x128xf32, #tpu.memory_space<vmem>>, vector<1x128xf32>
    %4 = vector.broadcast %3 : vector<1x128xf32> to vector<8x128xf32>
    %5 = arith.addf %2, %4 : vector<8x128xf32>
    %cst_5 = arith.constant 0.000000e+00 : f32
    %6 = vector.broadcast %cst_5 : f32 to vector<8x128xf32>
    %7 = arith.maximumf %5, %6 : vector<8x128xf32>
    %8 = arith.truncf %7 : vector<8x128xf32> to vector<8x128xbf16>
    %c0_6 = arith.constant 0 : index
    %c0_7 = arith.constant 0 : index
    %9 = vector.load %arg3[%c0_6, %c0_7] : memref<128x128xbf16, #tpu.memory_space<vmem>>, vector<128x128xbf16>
    %cst_8 = arith.constant dense<0.000000e+00> : vector<8x128xf32>
    %10 = tpu.matmul %8, %9, %cst_8 {dimension_numbers = #tpu.dot_dimension_numbers<[1], [0], [0], [1], [0, 0, 1, 1], [], []>} : vector<8x128xbf16>, vector<128x128xbf16>, vector<8x128xf32> -> vector<8x128xf32>
    %c0_9 = arith.constant 0 : index
    %c0_10 = arith.constant 0 : index
    %11 = vector.load %arg5[%c0_9, %c0_10] : memref<1x128xf32, #tpu.memory_space<vmem>>, vector<1x128xf32>
    %12 = vector.broadcast %11 : vector<1x128xf32> to vector<8x128xf32>
    %13 = arith.addf %10, %12 : vector<8x128xf32>
    %cst_11 = arith.constant 0.000000e+00 : f32
    %14 = vector.broadcast %cst_11 : f32 to vector<8x128xf32>
    %15 = arith.maximumf %13, %14 : vector<8x128xf32>
    %c0_12 = arith.constant 0 : index
    %c0_13 = arith.constant 0 : index
    %16 = vector.load %arg6[%c0_12, %c0_13] : memref<8x128xf32, #tpu.memory_space<vmem>>, vector<8x128xf32>
    tpu.vector_store %arg6[%c0_12, %c0_13], %15 {strides = array<i32>} : memref<8x128xf32, #tpu.memory_space<vmem>>, vector<8x128xf32>,
    return
  }
  func.func @transform_0(%arg0: i32) -> (i32, i32) {
    %c0_i32 = arith.constant 0 : i32
    %c0_i32_0 = arith.constant 0 : i32
    return %arg0, %c0_i32 : i32, i32
  }
  func.func @transform_1(%arg0: i32) -> (i32, i32) {
    %c0_i32 = arith.constant 0 : i32
    %c0_i32_0 = arith.constant 0 : i32
    %c0_i32_1 = arith.constant 0 : i32
    return %c0_i32, %c0_i32_0 : i32, i32
  }
  func.func @transform_2(%arg0: i32) -> (i32, i32) {
    %c0_i32 = arith.constant 0 : i32
    %c0_i32_0 = arith.constant 0 : i32
    %c0_i32_1 = arith.constant 0 : i32
    return %c0_i32, %c0_i32_0 : i32, i32
  }
  func.func @transform_3(%arg0: i32) -> (i32, i32) {
    %c0_i32 = arith.constant 0 : i32
    %c0_i32_0 = arith.constant 0 : i32
    %c0_i32_1 = arith.constant 0 : i32
    return %c0_i32, %c0_i32_0 : i32, i32
  }
  func.func @transform_4(%arg0: i32) -> (i32, i32) {
    %c0_i32 = arith.constant 0 : i32
    %c0_i32_0 = arith.constant 0 : i32
    %c0_i32_1 = arith.constant 0 : i32
    return %c0_i32, %c0_i32_0 : i32, i32
  }
  func.func @transform_5(%arg0: i32) -> (i32, i32) {
    %c0_i32 = arith.constant 0 : i32
    %c0_i32_0 = arith.constant 0 : i32
    return %arg0, %c0_i32 : i32, i32
  }
}

</mosaic_0001>

<llo_original>
// kernel: tpu_custom_call.1
$region0: #{tpu_custom_call.1}
  #allocation0 [shape = 'u32[]', space=smem, size = 0x4, offset = 0x4, fixed_abs, tag = 'smem constant byte address 0x4 - core index']
  #allocation1 [shape = 'u32[144,128]{1,0:T(1,128)}', space=vmem, size = 0x12000, scoped, tag = 'internal scratch']
  %s0 = inlined_call_operand.hbm [shape: bf16[8,128], index: 0, kind: input, shape index: {}]
  %s1 = inlined_call_operand.hbm [shape: bf16[128,128], index: 1, kind: input, shape index: {}]
  %s2 = inlined_call_operand.hbm [shape: bf16[128,128], index: 2, kind: input, shape index: {}]
  %s3 = inlined_call_operand.vmem [shape: f32[1,128], index: 3, kind: input, shape index: {}]
  %s4 = inlined_call_operand.vmem [shape: f32[1,128], index: 4, kind: input, shape index: {}]
  %s5 = inlined_call_operand.hbm [shape: f32[8,128], index: 5, kind: output, shape index: {}]
  %s6 = sld [smem:[#allocation0]]
  $region42: #{tpu_custom_call.1} parent=0
    _
  %s8 = ssub.s32 1, %s6
  %s9 = scalar_select 0, %s8, %s6
  $region1: #{tpu_custom_call.1} parent=0
    #allocation2 [shape = 'u8[2048]{0}', space=vmem, size = 0x800, scoped, tag = 'input window, operand 0, single buffered']
    #allocation3 [shape = 's32[1]{0}', space=sflag, size = 0x4, scoped, tag = 'scoped memory for tpu_custom_call.1']
    #allocation4 [shape = 's32[1]{0}', space=sflag, size = 0x4, scoped, tag = 'scoped memory for tpu_custom_call.1']
    #allocation5 [shape = 'u8[32768]{0}', space=vmem, size = 0x8000, scoped, tag = 'input window, operand 1, single buffered']
    #allocation6 [shape = 's32[1]{0}', space=sflag, size = 0x4, scoped, tag = 'scoped memory for tpu_custom_call.1']
    #allocation7 [shape = 'u8[32768]{0}', space=vmem, size = 0x8000, scoped, tag = 'input window, operand 2, single buffered']
    #allocation8 [shape = 'u8[4096]{0}', space=vmem, size = 0x1000, scoped, tag = 'output window, operand 0, single buffered']
    %10 = vsyncpa [#allocation3], 0
    %11 = vsyncpa [#allocation6], 0
    %12 = vsyncpa [#allocation4], 0
    // Predicated region
    $region2: #{tpu_custom_call.1} parent=1 // pred_check
      _
    $region3: #{tpu_custom_call.1} parent=1 // pred_check_branch
      %14 = sbr.rel (0) target = $region5
    $region4: #{tpu_custom_call.1} parent=1 // pred_region
      %s16 = ssub.s32 64, 64
      %17 = vsyncadd [#allocation3], %s16
      %s19 = sshll.u32 [#allocation2], 4
      %s20 = int_to_ptr.vmem [resolvable:$true] %s19
      %22 = dma.hbm_to_vmem [thread:$0]  %s0, 64, %s20, [#allocation3]
    $region5: #{tpu_custom_call.1} parent=1 // pred_fallthru
      _
    // Predicated region
    $region6: #{tpu_custom_call.1} parent=1 // pred_check
      _
    $region7: #{tpu_custom_call.1} parent=1 // pred_check_branch
      %24 = sbr.rel (0) target = $region9
    $region8: #{tpu_custom_call.1} parent=1 // pred_region
      %s26 = ssub.s32 1024, 1024
      %27 = vsyncadd [#allocation6], %s26
      %s28 = sshll.u32 [#allocation5], 4
      %s29 = int_to_ptr.vmem [resolvable:$true] %s28
      %34 = dma.hbm_to_vmem [thread:$0]  %s1, 1024, %s29, [#allocation6], 64, 64, 4
    $region9: #{tpu_custom_call.1} parent=1 // pred_fallthru
      _
    // Predicated region
    $region10: #{tpu_custom_call.1} parent=1 // pred_check
      _
    $region11: #{tpu_custom_call.1} parent=1 // pred_check_branch
      %36 = sbr.rel (0) target = $region13
    $region12: #{tpu_custom_call.1} parent=1 // pred_region
      %s38 = ssub.s32 1024, 1024
      %39 = vsyncadd [#allocation6], %s38
      %s40 = sshll.u32 [#allocation7], 4
      %s41 = int_to_ptr.vmem [resolvable:$true] %s40
      %46 = dma.hbm_to_vmem [thread:$0]  %s2, 1024, %s41, [#allocation6], 64, 64, 4
    $region13: #{tpu_custom_call.1} parent=1 // pred_fallthru
      _
    // Predicated region
    $region14: #{tpu_custom_call.1} parent=1 // pred_check
      _
    $region15: #{tpu_custom_call.1} parent=1 // pred_check_branch
      %48 = sbr.rel (0) target = $region17
    $region16: #{tpu_custom_call.1} parent=1 // pred_region
      _
    $region17: #{tpu_custom_call.1} parent=1 // pred_fallthru
      _
    // Predicated region
    $region18: #{tpu_custom_call.1} parent=1 // pred_check
      _
    $region19: #{tpu_custom_call.1} parent=1 // pred_check_branch
      %50 = sbr.rel (0) target = $region21
    $region20: #{tpu_custom_call.1} parent=1 // pred_region
      _
    $region21: #{tpu_custom_call.1} parent=1 // pred_fallthru
      _
    // Predicated region
    $region22: #{tpu_custom_call.1} parent=1 // pred_check
      _
    $region23: #{tpu_custom_call.1} parent=1 // pred_check_branch
      %52 = sbr.rel (0) target = $region25
    $region24: #{tpu_custom_call.1} parent=1 // pred_region
      %53 = dma.done [#allocation3], 64
    $region25: #{tpu_custom_call.1} parent=1 // pred_fallthru
      _
    // Predicated region
    $region26: #{tpu_custom_call.1} parent=1 // pred_check
      _
    $region27: #{tpu_custom_call.1} parent=1 // pred_check_branch
      %55 = sbr.rel (0) target = $region29
    $region28: #{tpu_custom_call.1} parent=1 // pred_region
      %56 = dma.done [#allocation6], 1024
    $region29: #{tpu_custom_call.1} parent=1 // pred_fallthru
      _
    // Predicated region
    $region30: #{tpu_custom_call.1} parent=1 // pred_check
      _
    $region31: #{tpu_custom_call.1} parent=1 // pred_check_branch
      %58 = sbr.rel (0) target = $region33
    $region32: #{tpu_custom_call.1} parent=1 // pred_region
      %59 = dma.done [#allocation6], 1024
    $region33: #{tpu_custom_call.1} parent=1 // pred_fallthru
      _
    %v61 = vld [vmem:[#allocation2] sm:$0xf]
    %v62 = vld [vmem:[#allocation5] sm:$0xf]
    %v63 = vld [vmem:[#allocation5 + $0x4] sm:$0xf]
    %v64 = vld [vmem:[#allocation5 + $0x8] sm:$0xf]
    %v65 = vld [vmem:[#allocation5 + $0xc] sm:$0xf]
    %v66 = vld [vmem:[#allocation5 + $0x10] sm:$0xf]
    %v67 = vld [vmem:[#allocation5 + $0x14] sm:$0xf]
    %v68 = vld [vmem:[#allocation5 + $0x18] sm:$0xf]
    %v69 = vld [vmem:[#allocation5 + $0x1c] sm:$0xf]
    %v70 = vld [vmem:[#allocation5 + $0x20] sm:$0xf]
    %v71 = vld [vmem:[#allocation5 + $0x24] sm:$0xf]
    %v72 = vld [vmem:[#allocation5 + $0x28] sm:$0xf]
    %v73 = vld [vmem:[#allocation5 + $0x2c] sm:$0xf]
    %v74 = vld [vmem:[#allocation5 + $0x30] sm:$0xf]
    %v75 = vld [vmem:[#allocation5 + $0x34] sm:$0xf]
    %v76 = vld [vmem:[#allocation5 + $0x38] sm:$0xf]
    %v77 = vld [vmem:[#allocation5 + $0x3c] sm:$0xf]
    %v78 = vld [vmem:[%s3] sm:$0x1]
    %v80 = vlaneseq
    %v81 = vshrl.u32 %v80, 7
    %v82 = vsub.s32 0, %v81
    %v83 = vrot.slane %v78, %v82
    %v101 = vunpack.c.l.b16 %v62
    %v102 = vunpack.c.l.b16 %v63
    %v103 = vunpack.c.l.b16 %v64
    %v104 = vunpack.c.l.b16 %v65
    %v105 = vunpack.c.l.b16 %v66
    %v106 = vunpack.c.l.b16 %v67
    %v107 = vunpack.c.l.b16 %v68
    %v108 = vunpack.c.l.b16 %v69
    %v109 = vunpack.c.l.b16 %v70
    %v110 = vunpack.c.l.b16 %v71
    %v111 = vunpack.c.l.b16 %v72
    %v112 = vunpack.c.l.b16 %v73
    %v113 = vunpack.c.l.b16 %v74
    %v114 = vunpack.c.l.b16 %v75
    %v115 = vunpack.c.l.b16 %v76
    %v116 = vunpack.c.l.b16 %v77
    %v117 = vpack.c.b16 %v102, %v101
    %v118 = vpack.c.b16 %v104, %v103
    %v119 = vpack.c.b16 %v106, %v105
    %v120 = vpack.c.b16 %v108, %v107
    %v121 = vpack.c.b16 %v110, %v109
    %v122 = vpack.c.b16 %v112, %v111
    %v123 = vpack.c.b16 %v114, %v113
    %v124 = vpack.c.b16 %v116, %v115
    %133 = vmatprep.subr.bf16.mxu0 0
    %134 = vmatpush1.bf16.msra.mxu0 %v117
    %135 = vmatprep.subr.bf16.mxu0 0
    %136 = vmatpush1.bf16.msra.mxu0 %v118
    %137 = vmatprep.subr.bf16.mxu0 0
    %138 = vmatpush1.bf16.msra.mxu0 %v119
    %139 = vmatprep.subr.bf16.mxu0 0
    %140 = vmatpush1.bf16.msra.mxu0 %v120
    %141 = vmatprep.subr.bf16.mxu0 0
    %142 = vmatpush1.bf16.msra.mxu0 %v121
    %143 = vmatprep.subr.bf16.mxu0 0
    %144 = vmatpush1.bf16.msra.mxu0 %v122
    %145 = vmatprep.subr.bf16.mxu0 0
    %146 = vmatpush1.bf16.msra.mxu0 %v123
    %147 = vmatprep.subr.bf16.mxu0 0
    %148 = vmatpush1.bf16.msra.mxu0 %v124
    %149 = vmatprep.subr.bf16.mxu0 0
    %150 = vmatpush1.bf16.msra.mxu0 0
    %151 = vmatprep.subr.bf16.mxu0 0
    %152 = vmatpush1.bf16.msra.mxu0 0
    %153 = vmatprep.subr.bf16.mxu0 0
    %154 = vmatpush1.bf16.msra.mxu0 0
    %155 = vmatprep.subr.bf16.mxu0 0
    %156 = vmatpush1.bf16.msra.mxu0 0
    %157 = vmatprep.subr.bf16.mxu0 0
    %158 = vmatpush1.bf16.msra.mxu0 0
    %159 = vmatprep.subr.bf16.mxu0 0
    %160 = vmatpush1.bf16.msra.mxu0 0
    %161 = vmatprep.subr.bf16.mxu0 0
    %162 = vmatpush1.bf16.msra.mxu0 0
    %163 = vmatprep.subr.bf16.mxu0 0
    %164 = vmatpush1.bf16.msra.mxu0 0
    %165 = vmatprep.mubr.bf16.mxu0 0
    %166 = vmatmul.mubr.bf16.gmra.mrb[0].mxu0 %v61
    %v167 = vpop.f32.mrb[0].mxu0
    %v168 = vadd.f32 %v83, %v167
    %v169 = vpop.f32.mrb[0].mxu0
    %v170 = vpop.f32.mrb[0].mxu0
    %v171 = vpop.f32.mrb[0].mxu0
    %172 = vdwg.mxu0
    %v173 = vmax.f32 %v168, 0.0
    %v174 = vpack.c.bf16 %v173, %v173
    %v175 = vld [vmem:[#allocation7] sm:$0xf]
    %v176 = vld [vmem:[#allocation7 + $0x4] sm:$0xf]
    %v177 = vld [vmem:[#allocation7 + $0x8] sm:$0xf]
    %v178 = vld [vmem:[#allocation7 + $0xc] sm:$0xf]
    %v179 = vld [vmem:[#allocation7 + $0x10] sm:$0xf]
    %v180 = vld [vmem:[#allocation7 + $0x14] sm:$0xf]
    %v181 = vld [vmem:[#allocation7 + $0x18] sm:$0xf]
    %v182 = vld [vmem:[#allocation7 + $0x1c] sm:$0xf]
    %v183 = vld [vmem:[#allocation7 + $0x20] sm:$0xf]
    %v184 = vld [vmem:[#allocation7 + $0x24] sm:$0xf]
    %v185 = vld [vmem:[#allocation7 + $0x28] sm:$0xf]
    %v186 = vld [vmem:[#allocation7 + $0x2c] sm:$0xf]
    %v187 = vld [vmem:[#allocation7 + $0x30] sm:$0xf]
    %v188 = vld [vmem:[#allocation7 + $0x34] sm:$0xf]
    %v189 = vld [vmem:[#allocation7 + $0x38] sm:$0xf]
    %v190 = vld [vmem:[#allocation7 + $0x3c] sm:$0xf]
    %v191 = vld [vmem:[%s4] sm:$0x1]
    %v193 = vlaneseq
    %v194 = vshrl.u32 %v193, 7
    %v195 = vsub.s32 0, %v194
    %v196 = vrot.slane %v191, %v195
    %v214 = vunpack.c.l.b16 %v175
    %v215 = vunpack.c.l.b16 %v176
    %v216 = vunpack.c.l.b16 %v177
    %v217 = vunpack.c.l.b16 %v178
    %v218 = vunpack.c.l.b16 %v179
    %v219 = vunpack.c.l.b16 %v180
    %v220 = vunpack.c.l.b16 %v181
    %v221 = vunpack.c.l.b16 %v182
    %v222 = vunpack.c.l.b16 %v183
    %v223 = vunpack.c.l.b16 %v184
    %v224 = vunpack.c.l.b16 %v185
    %v225 = vunpack.c.l.b16 %v186
    %v226 = vunpack.c.l.b16 %v187
    %v227 = vunpack.c.l.b16 %v188
    %v228 = vunpack.c.l.b16 %v189
    %v229 = vunpack.c.l.b16 %v190
    %v230 = vpack.c.b16 %v215, %v214
    %v231 = vpack.c.b16 %v217, %v216
    %v232 = vpack.c.b16 %v219, %v218
    %v233 = vpack.c.b16 %v221, %v220
    %v234 = vpack.c.b16 %v223, %v222
    %v235 = vpack.c.b16 %v225, %v224
    %v236 = vpack.c.b16 %v227, %v226
    %v237 = vpack.c.b16 %v229, %v228
    %246 = vmatprep.subr.bf16.mxu0 0
    %247 = vmatpush1.bf16.msra.mxu0 %v230
    %248 = vmatprep.subr.bf16.mxu0 0
    %249 = vmatpush1.bf16.msra.mxu0 %v231
    %250 = vmatprep.subr.bf16.mxu0 0
    %251 = vmatpush1.bf16.msra.mxu0 %v232
    %252 = vmatprep.subr.bf16.mxu0 0
    %253 = vmatpush1.bf16.msra.mxu0 %v233
    %254 = vmatprep.subr.bf16.mxu0 0
    %255 = vmatpush1.bf16.msra.mxu0 %v234
    %256 = vmatprep.subr.bf16.mxu0 0
    %257 = vmatpush1.bf16.msra.mxu0 %v235
    %258 = vmatprep.subr.bf16.mxu0 0
    %259 = vmatpush1.bf16.msra.mxu0 %v236
    %260 = vmatprep.subr.bf16.mxu0 0
    %261 = vmatpush1.bf16.msra.mxu0 %v237
    %262 = vmatprep.subr.bf16.mxu0 0
    %263 = vmatpush1.bf16.msra.mxu0 0
    %264 = vmatprep.subr.bf16.mxu0 0
    %265 = vmatpush1.bf16.msra.mxu0 0
    %266 = vmatprep.subr.bf16.mxu0 0
    %267 = vmatpush1.bf16.msra.mxu0 0
    %268 = vmatprep.subr.bf16.mxu0 0
    %269 = vmatpush1.bf16.msra.mxu0 0
    %270 = vmatprep.subr.bf16.mxu0 0
    %271 = vmatpush1.bf16.msra.mxu0 0
    %272 = vmatprep.subr.bf16.mxu0 0
    %273 = vmatpush1.bf16.msra.mxu0 0
    %274 = vmatprep.subr.bf16.mxu0 0
    %275 = vmatpush1.bf16.msra.mxu0 0
    %276 = vmatprep.subr.bf16.mxu0 0
    %277 = vmatpush1.bf16.msra.mxu0 0
    %278 = vmatprep.mubr.bf16.mxu0 0
    %279 = vmatmul.mubr.bf16.gmra.mrb[0].mxu0 %v174
    %v280 = vpop.f32.mrb[0].mxu0
    %v281 = vadd.f32 %v196, %v280
    %v282 = vpop.f32.mrb[0].mxu0
    %v283 = vpop.f32.mrb[0].mxu0
    %v284 = vpop.f32.mrb[0].mxu0
    %285 = vdwg.mxu0
    %v286 = vmax.f32 %v281, 0.0
    %287 = vst [vmem:[#allocation8] sm:$0xff] %v286
    // Predicated region
    $region34: #{tpu_custom_call.1} parent=1 // pred_check
      _
    $region35: #{tpu_custom_call.1} parent=1 // pred_check_branch
      %289 = sbr.rel (0) target = $region37
    $region36: #{tpu_custom_call.1} parent=1 // pred_region
      %s291 = ssub.s32 128, 128
      %292 = vsyncadd [#allocation4], %s291
      %s294 = sshll.u32 [#allocation8], 4
      %s295 = int_to_ptr.vmem [resolvable:$true] %s294
      %297 = dma.vmem_to_hbm [thread:$0]  %s295, 128, %s5, [#allocation4]
    $region37: #{tpu_custom_call.1} parent=1 // pred_fallthru
      _
    // Predicated region
    $region38: #{tpu_custom_call.1} parent=1 // pred_check
      _
    $region39: #{tpu_custom_call.1} parent=1 // pred_check_branch
      %299 = sbr.rel (0) target = $region41
    $region40: #{tpu_custom_call.1} parent=1 // pred_region
      %300 = dma.done [#allocation4], 128
    $region41: #{tpu_custom_call.1} parent=1 // pred_fallthru
      _
    %301 = vsyncpa [#allocation3], 1
    %302 = vsyncpa [#allocation6], 1
    %303 = vsyncpa [#allocation4], 1

// kernel: tpu_custom_call.1
$region0: #{tpu_custom_call.1}
  #allocation0 [shape = 'u32[]', space=smem, size = 0x4, offset = 0x4, fixed_abs, tag = 'smem constant byte address 0x4 - core index']
  #allocation1 [shape = 'u32[144,128]{1,0:T(1,128)}', space=vmem, size = 0x12000, scoped, tag = 'internal scratch']
  %s0 = inlined_call_operand.hbm [shape: bf16[8,128], index: 0, kind: input, shape index: {}]
  %s1 = inlined_call_operand.hbm [shape: bf16[128,128], index: 1, kind: input, shape index: {}]
  %s2 = inlined_call_operand.hbm [shape: bf16[128,128], index: 2, kind: input, shape index: {}]
  %s3 = inlined_call_operand.vmem [shape: f32[1,128], index: 3, kind: input, shape index: {}]
  %s4 = inlined_call_operand.vmem [shape: f32[1,128], index: 4, kind: input, shape index: {}]
  %s5 = inlined_call_operand.hbm [shape: f32[8,128], index: 5, kind: output, shape index: {}]
  %s6 = sld [smem:[#allocation0]]
  $region42: #{tpu_custom_call.1} parent=0
    _
  %s8 = ssub.s32 1, %s6
  %s9 = scalar_select 0, %s8, %s6
  $region1: #{tpu_custom_call.1} parent=0
    #allocation2 [shape = 'u8[2048]{0}', space=vmem, size = 0x800, scoped, tag = 'input window, operand 0, single buffered']
    #allocation3 [shape = 's32[1]{0}', space=sflag, size = 0x4, scoped, tag = 'scoped memory for tpu_custom_call.1']
    #allocation4 [shape = 's32[1]{0}', space=sflag, size = 0x4, scoped, tag = 'scoped memory for tpu_custom_call.1']
    #allocation5 [shape = 'u8[32768]{0}', space=vmem, size = 0x8000, scoped, tag = 'input window, operand 1, single buffered']
    #allocation6 [shape = 's32[1]{0}', space=sflag, size = 0x4, scoped, tag = 'scoped memory for tpu_custom_call.1']
    #allocation7 [shape = 'u8[32768]{0}', space=vmem, size = 0x8000, scoped, tag = 'input window, operand 2, single buffered']
    #allocation8 [shape = 'u8[4096]{0}', space=vmem, size = 0x1000, scoped, tag = 'output window, operand 0, single buffered']
    %10 = vsyncpa [#allocation3], 0
    %11 = vsyncpa [#allocation6], 0
    %12 = vsyncpa [#allocation4], 0
    // Predicated region
    $region2: #{tpu_custom_call.1} parent=1 // pred_check
      _
    $region3: #{tpu_custom_call.1} parent=1 // pred_check_branch
      %14 = sbr.rel (0) target = $region5
    $region4: #{tpu_custom_call.1} parent=1 // pred_region
      %s16 = ssub.s32 64, 64
      %17 = vsyncadd [#allocation3], %s16
      %s19 = sshll.u32 [#allocation2], 4
      %s20 = int_to_ptr.vmem [resolvable:$true] %s19
      %22 = dma.hbm_to_vmem [thread:$0]  %s0, 64, %s20, [#allocation3]
    $region5: #{tpu_custom_call.1} parent=1 // pred_fallthru
      _
    // Predicated region
    $region6: #{tpu_custom_call.1} parent=1 // pred_check
      _
    $region7: #{tpu_custom_call.1} parent=1 // pred_check_branch
      %24 = sbr.rel (0) target = $region9
    $region8: #{tpu_custom_call.1} parent=1 // pred_region
      %s26 = ssub.s32 1024, 1024
      %27 = vsyncadd [#allocation6], %s26
      %s28 = sshll.u32 [#allocation5], 4
      %s29 = int_to_ptr.vmem [resolvable:$true] %s28
      %34 = dma.hbm_to_vmem [thread:$0]  %s1, 1024, %s29, [#allocation6], 64, 64, 4
    $region9: #{tpu_custom_call.1} parent=1 // pred_fallthru
      _
    // Predicated region
    $region10: #{tpu_custom_call.1} parent=1 // pred_check
      _
    $region11: #{tpu_custom_call.1} parent=1 // pred_check_branch
      %36 = sbr.rel (0) target = $region13
    $region12: #{tpu_custom_call.1} parent=1 // pred_region
      %s38 = ssub.s32 1024, 1024
      %39 = vsyncadd [#allocation6], %s38
      %s40 = sshll.u32 [#allocation7], 4
      %s41 = int_to_ptr.vmem [resolvable:$true] %s40
      %46 = dma.hbm_to_vmem [thread:$0]  %s2, 1024, %s41, [#allocation6], 64, 64, 4
    $region13: #{tpu_custom_call.1} parent=1 // pred_fallthru
      _
    // Predicated region
    $region14: #{tpu_custom_call.1} parent=1 // pred_check
      _
    $region15: #{tpu_custom_call.1} parent=1 // pred_check_branch
      %48 = sbr.rel (0) target = $region17
    $region16: #{tpu_custom_call.1} parent=1 // pred_region
      _
    $region17: #{tpu_custom_call.1} parent=1 // pred_fallthru
      _
    // Predicated region
    $region18: #{tpu_custom_call.1} parent=1 // pred_check
      _
    $region19: #{tpu_custom_call.1} parent=1 // pred_check_branch
      %50 = sbr.rel (0) target = $region21
    $region20: #{tpu_custom_call.1} parent=1 // pred_region
      _
    $region21: #{tpu_custom_call.1} parent=1 // pred_fallthru
      _
    // Predicated region
    $region22: #{tpu_custom_call.1} parent=1 // pred_check
      _
    $region23: #{tpu_custom_call.1} parent=1 // pred_check_branch
      %52 = sbr.rel (0) target = $region25
    $region24: #{tpu_custom_call.1} parent=1 // pred_region
      %53 = dma.done [#allocation3], 64
    $region25: #{tpu_custom_call.1} parent=1 // pred_fallthru
      _
    // Predicated region
    $region26: #{tpu_custom_call.1} parent=1 // pred_check
      _
    $region27: #{tpu_custom_call.1} parent=1 // pred_check_branch
      %55 = sbr.rel (0) target = $region29
    $region28: #{tpu_custom_call.1} parent=1 // pred_region
      %56 = dma.done [#allocation6], 1024
    $region29: #{tpu_custom_call.1} parent=1 // pred_fallthru
      _
    // Predicated region
    $region30: #{tpu_custom_call.1} parent=1 // pred_check
      _
    $region31: #{tpu_custom_call.1} parent=1 // pred_check_branch
      %58 = sbr.rel (0) target = $region33
    $region32: #{tpu_custom_call.1} parent=1 // pred_region
      %59 = dma.done [#allocation6], 1024
    $region33: #{tpu_custom_call.1} parent=1 // pred_fallthru
      _
    %v61 = vld [vmem:[#allocation2] sm:$0xf]
    %v62 = vld [vmem:[#allocation5] sm:$0xf]
    %v63 = vld [vmem:[#allocation5 + $0x4] sm:$0xf]
    %v64 = vld [vmem:[#allocation5 + $0x8] sm:$0xf]
    %v65 = vld [vmem:[#allocation5 + $0xc] sm:$0xf]
    %v66 = vld [vmem:[#allocation5 + $0x10] sm:$0xf]
    %v67 = vld [vmem:[#allocation5 + $0x14] sm:$0xf]
    %v68 = vld [vmem:[#allocation5 + $0x18] sm:$0xf]
    %v69 = vld [vmem:[#allocation5 + $0x1c] sm:$0xf]
    %v70 = vld [vmem:[#allocation5 + $0x20] sm:$0xf]
    %v71 = vld [vmem:[#allocation5 + $0x24] sm:$0xf]
    %v72 = vld [vmem:[#allocation5 + $0x28] sm:$0xf]
    %v73 = vld [vmem:[#allocation5 + $0x2c] sm:$0xf]
    %v74 = vld [vmem:[#allocation5 + $0x30] sm:$0xf]
    %v75 = vld [vmem:[#allocation5 + $0x34] sm:$0xf]
    %v76 = vld [vmem:[#allocation5 + $0x38] sm:$0xf]
    %v77 = vld [vmem:[#allocation5 + $0x3c] sm:$0xf]
    %v78 = vld [vmem:[%s3] sm:$0x1]
    %v80 = vlaneseq
    %v81 = vshrl.u32 %v80, 7
    %v82 = vsub.s32 0, %v81
    %v83 = vrot.slane %v78, %v82
    %v101 = vunpack.c.l.b16 %v62
    %v102 = vunpack.c.l.b16 %v63
    %v103 = vunpack.c.l.b16 %v64
    %v104 = vunpack.c.l.b16 %v65
    %v105 = vunpack.c.l.b16 %v66
    %v106 = vunpack.c.l.b16 %v67
    %v107 = vunpack.c.l.b16 %v68
    %v108 = vunpack.c.l.b16 %v69
    %v109 = vunpack.c.l.b16 %v70
    %v110 = vunpack.c.l.b16 %v71
    %v111 = vunpack.c.l.b16 %v72
    %v112 = vunpack.c.l.b16 %v73
    %v113 = vunpack.c.l.b16 %v74
    %v114 = vunpack.c.l.b16 %v75
    %v115 = vunpack.c.l.b16 %v76
    %v116 = vunpack.c.l.b16 %v77
    %v117 = vpack.c.b16 %v102, %v101
    %v118 = vpack.c.b16 %v104, %v103
    %v119 = vpack.c.b16 %v106, %v105
    %v120 = vpack.c.b16 %v108, %v107
    %v121 = vpack.c.b16 %v110, %v109
    %v122 = vpack.c.b16 %v112, %v111
    %v123 = vpack.c.b16 %v114, %v113
    %v124 = vpack.c.b16 %v116, %v115
    %133 = vmatprep.subr.bf16.mxu0 0
    %134 = vmatpush1.bf16.msra.mxu0 %v117
    %135 = vmatprep.subr.bf16.mxu0 0
    %136 = vmatpush1.bf16.msra.mxu0 %v118
    %137 = vmatprep.subr.bf16.mxu0 0
    %138 = vmatpush1.bf16.msra.mxu0 %v119
    %139 = vmatprep.subr.bf16.mxu0 0
    %140 = vmatpush1.bf16.msra.mxu0 %v120
    %141 = vmatprep.subr.bf16.mxu0 0
    %142 = vmatpush1.bf16.msra.mxu0 %v121
    %143 = vmatprep.subr.bf16.mxu0 0
    %144 = vmatpush1.bf16.msra.mxu0 %v122
    %145 = vmatprep.subr.bf16.mxu0 0
    %146 = vmatpush1.bf16.msra.mxu0 %v123
    %147 = vmatprep.subr.bf16.mxu0 0
    %148 = vmatpush1.bf16.msra.mxu0 %v124
    %149 = vmatprep.subr.bf16.mxu0 0
    %150 = vmatpush1.bf16.msra.mxu0 0
    %151 = vmatprep.subr.bf16.mxu0 0
    %152 = vmatpush1.bf16.msra.mxu0 0
    %153 = vmatprep.subr.bf16.mxu0 0
    %154 = vmatpush1.bf16.msra.mxu0 0
    %155 = vmatprep.subr.bf16.mxu0 0
    %156 = vmatpush1.bf16.msra.mxu0 0
    %157 = vmatprep.subr.bf16.mxu0 0
    %158 = vmatpush1.bf16.msra.mxu0 0
    %159 = vmatprep.subr.bf16.mxu0 0
    %160 = vmatpush1.bf16.msra.mxu0 0
    %161 = vmatprep.subr.bf16.mxu0 0
    %162 = vmatpush1.bf16.msra.mxu0 0
    %163 = vmatprep.subr.bf16.mxu0 0
    %164 = vmatpush1.bf16.msra.mxu0 0
    %165 = vmatprep.mubr.bf16.mxu0 0
    %166 = vmatmul.mubr.bf16.gmra.mrb[0].mxu0 %v61
    %v167 = vpop.f32.mrb[0].mxu0
    %v168 = vadd.f32 %v83, %v167
    %v169 = vpop.f32.mrb[0].mxu0
    %v170 = vpop.f32.mrb[0].mxu0
    %v171 = vpop.f32.mrb[0].mxu0
    %172 = vdwg.mxu0
    %v173 = vmax.f32 %v168, 0.0
    %v174 = vpack.c.bf16 %v173, %v173
    %v175 = vld [vmem:[#allocation7] sm:$0xf]
    %v176 = vld [vmem:[#allocation7 + $0x4] sm:$0xf]
    %v177 = vld [vmem:[#allocation7 + $0x8] sm:$0xf]
    %v178 = vld [vmem:[#allocation7 + $0xc] sm:$0xf]
    %v179 = vld [vmem:[#allocation7 + $0x10] sm:$0xf]
    %v180 = vld [vmem:[#allocation7 + $0x14] sm:$0xf]
    %v181 = vld [vmem:[#allocation7 + $0x18] sm:$0xf]
    %v182 = vld [vmem:[#allocation7 + $0x1c] sm:$0xf]
    %v183 = vld [vmem:[#allocation7 + $0x20] sm:$0xf]
    %v184 = vld [vmem:[#allocation7 + $0x24] sm:$0xf]
    %v185 = vld [vmem:[#allocation7 + $0x28] sm:$0xf]
    %v186 = vld [vmem:[#allocation7 + $0x2c] sm:$0xf]
    %v187 = vld [vmem:[#allocation7 + $0x30] sm:$0xf]
    %v188 = vld [vmem:[#allocation7 + $0x34] sm:$0xf]
    %v189 = vld [vmem:[#allocation7 + $0x38] sm:$0xf]
    %v190 = vld [vmem:[#allocation7 + $0x3c] sm:$0xf]
    %v191 = vld [vmem:[%s4] sm:$0x1]
    %v193 = vlaneseq
    %v194 = vshrl.u32 %v193, 7
    %v195 = vsub.s32 0, %v194
    %v196 = vrot.slane %v191, %v195
    %v214 = vunpack.c.l.b16 %v175
    %v215 = vunpack.c.l.b16 %v176
    %v216 = vunpack.c.l.b16 %v177
    %v217 = vunpack.c.l.b16 %v178
    %v218 = vunpack.c.l.b16 %v179
    %v219 = vunpack.c.l.b16 %v180
    %v220 = vunpack.c.l.b16 %v181
    %v221 = vunpack.c.l.b16 %v182
    %v222 = vunpack.c.l.b16 %v183
    %v223 = vunpack.c.l.b16 %v184
    %v224 = vunpack.c.l.b16 %v185
    %v225 = vunpack.c.l.b16 %v186
    %v226 = vunpack.c.l.b16 %v187
    %v227 = vunpack.c.l.b16 %v188
    %v228 = vunpack.c.l.b16 %v189
    %v229 = vunpack.c.l.b16 %v190
    %v230 = vpack.c.b16 %v215, %v214
    %v231 = vpack.c.b16 %v217, %v216
    %v232 = vpack.c.b16 %v219, %v218
    %v233 = vpack.c.b16 %v221, %v220
    %v234 = vpack.c.b16 %v223, %v222
    %v235 = vpack.c.b16 %v225, %v224
    %v236 = vpack.c.b16 %v227, %v226
    %v237 = vpack.c.b16 %v229, %v228
    %246 = vmatprep.subr.bf16.mxu0 0
    %247 = vmatpush1.bf16.msra.mxu0 %v230
    %248 = vmatprep.subr.bf16.mxu0 0
    %249 = vmatpush1.bf16.msra.mxu0 %v231
    %250 = vmatprep.subr.bf16.mxu0 0
    %251 = vmatpush1.bf16.msra.mxu0 %v232
    %252 = vmatprep.subr.bf16.mxu0 0
    %253 = vmatpush1.bf16.msra.mxu0 %v233
    %254 = vmatprep.subr.bf16.mxu0 0
    %255 = vmatpush1.bf16.msra.mxu0 %v234
    %256 = vmatprep.subr.bf16.mxu0 0
    %257 = vmatpush1.bf16.msra.mxu0 %v235
    %258 = vmatprep.subr.bf16.mxu0 0
    %259 = vmatpush1.bf16.msra.mxu0 %v236
    %260 = vmatprep.subr.bf16.mxu0 0
    %261 = vmatpush1.bf16.msra.mxu0 %v237
    %262 = vmatprep.subr.bf16.mxu0 0
    %263 = vmatpush1.bf16.msra.mxu0 0
    %264 = vmatprep.subr.bf16.mxu0 0
    %265 = vmatpush1.bf16.msra.mxu0 0
    %266 = vmatprep.subr.bf16.mxu0 0
    %267 = vmatpush1.bf16.msra.mxu0 0
    %268 = vmatprep.subr.bf16.mxu0 0
    %269 = vmatpush1.bf16.msra.mxu0 0
    %270 = vmatprep.subr.bf16.mxu0 0
    %271 = vmatpush1.bf16.msra.mxu0 0
    %272 = vmatprep.subr.bf16.mxu0 0
    %273 = vmatpush1.bf16.msra.mxu0 0
    %274 = vmatprep.subr.bf16.mxu0 0
    %275 = vmatpush1.bf16.msra.mxu0 0
    %276 = vmatprep.subr.bf16.mxu0 0
    %277 = vmatpush1.bf16.msra.mxu0 0
    %278 = vmatprep.mubr.bf16.mxu0 0
    %279 = vmatmul.mubr.bf16.gmra.mrb[0].mxu0 %v174
    %v280 = vpop.f32.mrb[0].mxu0
    %v281 = vadd.f32 %v196, %v280
    %v282 = vpop.f32.mrb[0].mxu0
    %v283 = vpop.f32.mrb[0].mxu0
    %v284 = vpop.f32.mrb[0].mxu0
    %285 = vdwg.mxu0
    %v286 = vmax.f32 %v281, 0.0
    %287 = vst [vmem:[#allocation8] sm:$0xff] %v286
    // Predicated region
    $region34: #{tpu_custom_call.1} parent=1 // pred_check
      _
    $region35: #{tpu_custom_call.1} parent=1 // pred_check_branch
      %289 = sbr.rel (0) target = $region37
    $region36: #{tpu_custom_call.1} parent=1 // pred_region
      %s291 = ssub.s32 128, 128
      %292 = vsyncadd [#allocation4], %s291
      %s294 = sshll.u32 [#allocation8], 4
      %s295 = int_to_ptr.vmem [resolvable:$true] %s294
      %297 = dma.vmem_to_hbm [thread:$0]  %s295, 128, %s5, [#allocation4]
    $region37: #{tpu_custom_call.1} parent=1 // pred_fallthru
      _
    // Predicated region
    $region38: #{tpu_custom_call.1} parent=1 // pred_check
      _
    $region39: #{tpu_custom_call.1} parent=1 // pred_check_branch
      %299 = sbr.rel (0) target = $region41
    $region40: #{tpu_custom_call.1} parent=1 // pred_region
      %300 = dma.done [#allocation4], 128
    $region41: #{tpu_custom_call.1} parent=1 // pred_fallthru
      _
    %301 = vsyncpa [#allocation3], 1
    %302 = vsyncpa [#allocation6], 1
    %303 = vsyncpa [#allocation4], 1

</llo_original>
